<compile_context>
chip_gen: v7x
topology: tpu7x:2x2x1
jax: 0.10.0
libtpu: 0.0.40
codegen_flags: <defaults>
</compile_context>

<pallas_src>
import functools

import jax
import jax.numpy as jnp
from jax import lax
from jax.experimental import pallas as pl
from jax.experimental.pallas import tpu as pltpu


def _dwconv_kernel(x_ref, masks_ref, wdw_ref, b1_ref, wpw_ref, b2_ref, o_ref,
                   *, H, W, n_per_step, cin, cout, use_mxu):
    """One batch group per grid step. Packed (batch, channel) rows on sublanes,
    flattened H*W on lanes.

    x_ref   : (1, Nb*Cin, H*W)   input rows ordered n-major, c-minor
    masks_ref: (4, H*W) f32      0/1 edge masks [w>=1, w<=W-2, h>=1, h<=H-2]
    wdw_ref : (9, Nb*Cin, 1)     depthwise 3x3 weights (BN1 scale folded), tiled over Nb
    b1_ref  : (Nb*Cin, 1)        folded BN1 shift, tiled over Nb
    wpw_ref : (Cin, Cout, 1)     pointwise weights (BN2 scale folded)  [VPU path]
              (Cin, Cout)                                              [MXU path]
    b2_ref  : (Cout, 1)          folded BN2 shift
    o_ref   : (1, Nb*Cout, H*W)
    """
    HW = H * W
    x = x_ref[0].astype(jnp.float32)                       # (R, HW), R = Nb*Cin

    w_ge1 = masks_ref[0:1, :]                              # w >= 1    (dx = -1 taps)
    w_lt = masks_ref[1:2, :]                               # w <= W-2  (dx = +1 taps)
    h_ge1 = masks_ref[2:3, :]                              # h >= 1    (dy = -1 taps)
    h_lt = masks_ref[3:4, :]                               # h <= H-2  (dy = +1 taps)

    # ---- depthwise 3x3, stride 1, zero pad: factored stencil (4 XLU rolls) ----
    # Lane-shifted copies of x; wrapped lanes always fall in masked-off columns.
    x_m1 = pltpu.roll(x, 1, 1) * w_ge1                     # value at (h, w-1)
    x_p1 = pltpu.roll(x, HW - 1, 1) * w_lt                 # value at (h, w+1)

    def row_sum(dy):
        base = (dy + 1) * 3
        return (x_m1 * wdw_ref[base + 0].astype(jnp.float32)
                + x * wdw_ref[base + 1].astype(jnp.float32)
                + x_p1 * wdw_ref[base + 2].astype(jnp.float32))

    r_m1 = row_sum(-1)                                     # taps from the row above
    r_0 = row_sum(0)
    r_p1 = row_sum(1)                                      # taps from the row below

    # Row shifts preserve the w coordinate, so the w masks baked into x_m1/x_p1
    # remain valid; wrapped rows are zeroed by the h masks.
    acc = (r_0
           + pltpu.roll(r_m1, W, 1) * h_ge1                # out[p] = r_m1[p - W]
           + pltpu.roll(r_p1, HW - W, 1) * h_lt)           # out[p] = r_p1[p + W]

    # ---- BN1 shift (scale folded into wdw) + ReLU -----------------------------
    y1 = jnp.maximum(acc + b1_ref[...].astype(jnp.float32), 0.0)   # (R, HW)

    # ---- pointwise 1x1 + BN2 shift (scale folded into wpw) + ReLU -------------
    b2 = b2_ref[...].astype(jnp.float32)                   # (Cout, 1)
    if use_mxu:
        wpw_bf16 = wpw_ref[...].astype(jnp.bfloat16)       # (Cin, Cout)
    else:
        wpw = wpw_ref[...].astype(jnp.float32)             # (Cin, Cout, 1)

    for n in range(n_per_step):
        y1_n = y1[n * cin:(n + 1) * cin, :]                # (Cin, HW), static slice
        if use_mxu:
            # Large channels: contract Cin on the MXU, bf16 operands, f32 accumulate.
            z = lax.dot_general(
                wpw_bf16, y1_n.astype(jnp.bfloat16),
                dimension_numbers=(((0,), (0,)), ((), ())),
                preferred_element_type=jnp.float32)        # (Cout, HW)
        else:
            # Tiny Cin/Cout: Cin broadcast-MACs on the VPU beat a near-empty MXU call.
            z = None
            for ci in range(cin):
                contrib = wpw[ci] * y1_n[ci:ci + 1, :]     # (Cout, HW)
                z = contrib if z is None else z + contrib
        z = jnp.maximum(z + b2, 0.0)
        o_ref[0, n * cout:(n + 1) * cout, :] = z.astype(o_ref.dtype)


def _tpu_device_kind():
    try:
        return jax.devices()[0].device_kind.lower()
    except Exception:
        return ""


def dwconv_forward(x_nchw, params, *, mxu_channel_threshold=None):
    """x_nchw: (N, Cin, H, W) -> (N, Cout, H, W). Inference-mode BN folded."""
    wdw, g1, be1, m1, v1, wpw, g2, be2, m2, v2 = params
    eps = 1e-5
    cin = wdw.shape[-1]
    cout = wpw.shape[-1]
    N, _, H, W = x_nchw.shape
    HW = H * W

    kind = _tpu_device_kind()
    # v7x has 2 TensorCores per chip: keep >= 2 parallel grid steps there;
    # on v5e/v6e (1 TC) a single fully packed step is strictly better.
    n_cores = 2 if "v7" in kind else 1
    # MXU crossover is generation-dependent (128-wide MXU on v5e, 256 on v6e/v7x).
    if mxu_channel_threshold is None:
        mxu_channel_threshold = 128 if "v5" in kind else 256

    n_groups = n_cores if (N >= n_cores and N % n_cores == 0) else 1
    n_per_step = N // n_groups

    # Fold BN into conv-weight scales + per-channel shifts.
    s1 = g1 / jnp.sqrt(v1 + eps)
    b1 = (be1 - m1 * s1).astype(jnp.float32)                        # (Cin,)
    wdw_s = (wdw * s1[None, :]).astype(jnp.float32)                 # (9, Cin)

    s2 = g2 / jnp.sqrt(v2 + eps)
    b2 = (be2 - m2 * s2).reshape(cout, 1).astype(jnp.float32)
    wpw_s = (wpw * s2[None, :]).astype(jnp.float32)                 # (Cin, Cout)

    # Tile per-channel depthwise params along the packed batch (row = n*Cin + c).
    wdw_packed = jnp.tile(wdw_s, (1, n_per_step)).reshape(9, n_per_step * cin, 1)
    b1_packed = jnp.tile(b1, n_per_step).reshape(n_per_step * cin, 1)

    use_mxu = (cin >= mxu_channel_threshold and cout >= mxu_channel_threshold)
    if use_mxu:
        wpw_in = wpw_s                                              # (Cin, Cout)
        wpw_spec = pl.BlockSpec((cin, cout), lambda g: (0, 0))
    else:
        wpw_in = wpw_s.reshape(cin, cout, 1)                        # sublane-ready columns
        wpw_spec = pl.BlockSpec((cin, cout, 1), lambda g: (0, 0, 0))

    # 0/1 edge masks, precomputed once (no in-kernel iota / int compares / selects).
    hw = jnp.arange(HW, dtype=jnp.int32)
    h_idx, w_idx = hw // W, hw % W
    masks = jnp.stack([(w_idx >= 1), (w_idx <= W - 2),
                       (h_idx >= 1), (h_idx <= H - 2)], axis=0).astype(jnp.float32)

    # Lane-dense layout: packed (batch, channel) rows on sublanes, H*W on lanes.
    # Free reshape (no transpose, no padding).
    x_packed = x_nchw.reshape(n_groups, n_per_step * cin, HW)

    kernel = functools.partial(_dwconv_kernel, H=H, W=W, n_per_step=n_per_step,
                               cin=cin, cout=cout, use_mxu=use_mxu)

    out_packed = pl.pallas_call(
        kernel,
        out_shape=jax.ShapeDtypeStruct((n_groups, n_per_step * cout, HW), x_nchw.dtype),
        grid_spec=pltpu.PrefetchScalarGridSpec(
            num_scalar_prefetch=0,
            grid=(n_groups,),
            in_specs=[
                pl.BlockSpec((1, n_per_step * cin, HW), lambda g: (g, 0, 0)),
                pl.BlockSpec((4, HW), lambda g: (0, 0)),
                pl.BlockSpec((9, n_per_step * cin, 1), lambda g: (0, 0, 0)),
                pl.BlockSpec((n_per_step * cin, 1), lambda g: (0, 0)),
                wpw_spec,
                pl.BlockSpec((cout, 1), lambda g: (0, 0)),
            ],
            out_specs=pl.BlockSpec((1, n_per_step * cout, HW), lambda g: (g, 0, 0)),
        ),
        compiler_params=pltpu.CompilerParams(
            dimension_semantics=("parallel",),
            vmem_limit_bytes=32 * 1024 * 1024),
    )(x_packed, masks, wdw_packed, b1_packed, wpw_in, b2)

    return out_packed.reshape(N, cout, H, W)


def _reference(x_nchw, params):
    """Plain-JAX reference (NCHW, same math) for a sanity check."""
    wdw, g1, be1, m1, v1, wpw, g2, be2, m2, v2 = params
    eps = 1e-5
    cin = wdw.shape[-1]
    x = x_nchw.astype(jnp.float32)
    # depthwise 3x3 via grouped conv: weights (Cin, 1, 3, 3) in OIHW
    w_dw = jnp.transpose(wdw.reshape(3, 3, cin), (2, 0, 1))[:, None, :, :]
    y = jax.lax.conv_general_dilated(
        x, w_dw, window_strides=(1, 1), padding=((1, 1), (1, 1)),
        dimension_numbers=("NCHW", "OIHW", "NCHW"), feature_group_count=cin)
    y = (y - m1[None, :, None, None]) / jnp.sqrt(v1 + eps)[None, :, None, None]
    y = y * g1[None, :, None, None] + be1[None, :, None, None]
    y = jnp.maximum(y, 0.0)
    w_pw = jnp.transpose(wpw, (1, 0))[:, :, None, None]             # (Cout,Cin,1,1)
    z = jax.lax.conv_general_dilated(
        y, w_pw, window_strides=(1, 1), padding=((0, 0), (0, 0)),
        dimension_numbers=("NCHW", "OIHW", "NCHW"))
    z = (z - m2[None, :, None, None]) / jnp.sqrt(v2 + eps)[None, :, None, None]
    z = z * g2[None, :, None, None] + be2[None, :, None, None]
    return jnp.maximum(z, 0.0).astype(x_nchw.dtype)


if __name__ == "__main__":
    key = jax.random.PRNGKey(0)
    N, Cin, Cout, H, W = 2, 4, 8, 16, 16

    ks = jax.random.split(key, 8)
    x = jax.random.normal(ks[0], (N, Cin, H, W), jnp.float32)

    # Parameters (deterministic init):
    wdw = jax.random.normal(ks[1], (9, Cin), jnp.float32) * 0.2   # depthwise 3x3, (ky*3+kx, Cin)
    g1  = 1.0 + 0.1 * jax.random.normal(ks[2], (Cin,), jnp.float32)
    be1 = 0.1 * jax.random.normal(ks[3], (Cin,), jnp.float32)
    m1  = 0.05 * jax.random.normal(ks[4], (Cin,), jnp.float32)
    v1  = jnp.abs(1.0 + 0.1 * jax.random.normal(ks[5], (Cin,), jnp.float32))
    wpw = jax.random.normal(ks[6], (Cin, Cout), jnp.float32) * 0.2  # pointwise 1x1
    g2  = 1.0 + 0.1 * jax.random.normal(ks[7], (Cout,), jnp.float32)
    be2 = jnp.linspace(-0.1, 0.1, Cout, dtype=jnp.float32)
    m2  = jnp.linspace(-0.05, 0.05, Cout, dtype=jnp.float32)
    v2  = jnp.linspace(0.9, 1.1, Cout, dtype=jnp.float32)

    params = (wdw, g1, be1, m1, v1, wpw, g2, be2, m2, v2)

    out = dwconv_forward(x, params)
    out = jax.block_until_ready(out)

    ref = _reference(x, params)
    assert out.shape == (N, Cout, H, W)
    assert jnp.allclose(out, ref, atol=1e-4, rtol=1e-4), "mismatch vs reference"

    print("KERNEL_OK")
</pallas_src>

<mosaic_0001>
module attributes {stable_mosaic.version = 11 : i64} {
  func.func @_dwconv_kernel(%arg0: i32, %arg1: memref<1x8x256xf32, #tpu.memory_space<vmem>>, %arg2: memref<4x256xf32, #tpu.memory_space<vmem>>, %arg3: memref<9x8x1xf32, #tpu.memory_space<vmem>>, %arg4: memref<8x1xf32, #tpu.memory_space<vmem>>, %arg5: memref<4x8x1xf32, #tpu.memory_space<vmem>>, %arg6: memref<8x1xf32, #tpu.memory_space<vmem>>, %arg7: memref<1x16x256xf32, #tpu.memory_space<vmem>>) attributes {dimension_semantics = [#tpu.dimension_semantics<parallel>], iteration_bounds = array<i64: 1>, scalar_prefetch = 0 : i64, scratch_operands = 0 : i64, tpu.core_type = #tpu.core_type<tc>, window_params = [{transform_indices = @transform_0, window_bounds = array<i64: 1, 8, 256>}, {pipeline_mode = #tpu.pipeline_mode<synchronous>, transform_indices = @transform_1, window_bounds = array<i64: 4, 256>}, {pipeline_mode = #tpu.pipeline_mode<synchronous>, transform_indices = @transform_2, window_bounds = array<i64: 9, 8, 1>}, {pipeline_mode = #tpu.pipeline_mode<synchronous>, transform_indices = @transform_3, window_bounds = array<i64: 8, 1>}, {pipeline_mode = #tpu.pipeline_mode<synchronous>, transform_indices = @transform_4, window_bounds = array<i64: 4, 8, 1>}, {pipeline_mode = #tpu.pipeline_mode<synchronous>, transform_indices = @transform_5, window_bounds = array<i64: 8, 1>}, {transform_indices = @transform_6, window_bounds = array<i64: 1, 16, 256>}]} {
    %c0 = arith.constant 0 : index
    %c0_0 = arith.constant 0 : index
    %c0_1 = arith.constant 0 : index
    %0 = vector.load %arg1[%c0, %c0_0, %c0_1] : memref<1x8x256xf32, #tpu.memory_space<vmem>>, vector<1x8x256xf32>
    %1 = vector.shape_cast %0 : vector<1x8x256xf32> to vector<8x256xf32>
    %c0_2 = arith.constant 0 : index
    %c0_3 = arith.constant 0 : index
    %2 = vector.load %arg2[%c0_2, %c0_3] : memref<4x256xf32, #tpu.memory_space<vmem>>, vector<1x256xf32>
    %c1 = arith.constant 1 : index
    %c0_4 = arith.constant 0 : index
    %3 = vector.load %arg2[%c1, %c0_4] : memref<4x256xf32, #tpu.memory_space<vmem>>, vector<1x256xf32>
    %c2 = arith.constant 2 : index
    %c0_5 = arith.constant 0 : index
    %4 = vector.load %arg2[%c2, %c0_5] : memref<4x256xf32, #tpu.memory_space<vmem>>, vector<1x256xf32>
    %c3 = arith.constant 3 : index
    %c0_6 = arith.constant 0 : index
    %5 = vector.load %arg2[%c3, %c0_6] : memref<4x256xf32, #tpu.memory_space<vmem>>, vector<1x256xf32>
    %c1_i32 = arith.constant 1 : i32
    %6 = tpu.dynamic_rotate %1 by %c1_i32 dim 1 : vector<8x256xf32>, i32 -> vector<8x256xf32>
    %7 = vector.broadcast %2 : vector<1x256xf32> to vector<8x256xf32>
    %8 = arith.mulf %6, %7 : vector<8x256xf32>
    %c255_i32 = arith.constant 255 : i32
    %9 = tpu.dynamic_rotate %1 by %c255_i32 dim 1 : vector<8x256xf32>, i32 -> vector<8x256xf32>
    %10 = vector.broadcast %3 : vector<1x256xf32> to vector<8x256xf32>
    %11 = arith.mulf %9, %10 : vector<8x256xf32>
    %c0_7 = arith.constant 0 : index
    %c0_8 = arith.constant 0 : index
    %c0_9 = arith.constant 0 : index
    %12 = vector.load %arg3[%c0_7, %c0_8, %c0_9] : memref<9x8x1xf32, #tpu.memory_space<vmem>>, vector<1x8x1xf32>
    %13 = vector.shape_cast %12 : vector<1x8x1xf32> to vector<8x1xf32>
    %14 = vector.broadcast %13 : vector<8x1xf32> to vector<8x256xf32>
    %15 = arith.mulf %8, %14 : vector<8x256xf32>
    %c1_10 = arith.constant 1 : index
    %c0_11 = arith.constant 0 : index
    %c0_12 = arith.constant 0 : index
    %16 = vector.load %arg3[%c1_10, %c0_11, %c0_12] : memref<9x8x1xf32, #tpu.memory_space<vmem>>, vector<1x8x1xf32>
    %17 = vector.shape_cast %16 : vector<1x8x1xf32> to vector<8x1xf32>
    %18 = vector.broadcast %17 : vector<8x1xf32> to vector<8x256xf32>
    %19 = arith.mulf %1, %18 : vector<8x256xf32>
    %20 = arith.addf %15, %19 : vector<8x256xf32>
    %c2_13 = arith.constant 2 : index
    %c0_14 = arith.constant 0 : index
    %c0_15 = arith.constant 0 : index
    %21 = vector.load %arg3[%c2_13, %c0_14, %c0_15] : memref<9x8x1xf32, #tpu.memory_space<vmem>>, vector<1x8x1xf32>
    %22 = vector.shape_cast %21 : vector<1x8x1xf32> to vector<8x1xf32>
    %23 = vector.broadcast %22 : vector<8x1xf32> to vector<8x256xf32>
    %24 = arith.mulf %11, %23 : vector<8x256xf32>
    %25 = arith.addf %20, %24 : vector<8x256xf32>
    %c3_16 = arith.constant 3 : index
    %c0_17 = arith.constant 0 : index
    %c0_18 = arith.constant 0 : index
    %26 = vector.load %arg3[%c3_16, %c0_17, %c0_18] : memref<9x8x1xf32, #tpu.memory_space<vmem>>, vector<1x8x1xf32>
    %27 = vector.shape_cast %26 : vector<1x8x1xf32> to vector<8x1xf32>
    %28 = vector.broadcast %27 : vector<8x1xf32> to vector<8x256xf32>
    %29 = arith.mulf %8, %28 : vector<8x256xf32>
    %c4 = arith.constant 4 : index
    %c0_19 = arith.constant 0 : index
    %c0_20 = arith.constant 0 : index
    %30 = vector.load %arg3[%c4, %c0_19, %c0_20] : memref<9x8x1xf32, #tpu.memory_space<vmem>>, vector<1x8x1xf32>
    %31 = vector.shape_cast %30 : vector<1x8x1xf32> to vector<8x1xf32>
    %32 = vector.broadcast %31 : vector<8x1xf32> to vector<8x256xf32>
    %33 = arith.mulf %1, %32 : vector<8x256xf32>
    %34 = arith.addf %29, %33 : vector<8x256xf32>
    %c5 = arith.constant 5 : index
    %c0_21 = arith.constant 0 : index
    %c0_22 = arith.constant 0 : index
    %35 = vector.load %arg3[%c5, %c0_21, %c0_22] : memref<9x8x1xf32, #tpu.memory_space<vmem>>, vector<1x8x1xf32>
    %36 = vector.shape_cast %35 : vector<1x8x1xf32> to vector<8x1xf32>
    %37 = vector.broadcast %36 : vector<8x1xf32> to vector<8x256xf32>
    %38 = arith.mulf %11, %37 : vector<8x256xf32>
    %39 = arith.addf %34, %38 : vector<8x256xf32>
    %c6 = arith.constant 6 : index
    %c0_23 = arith.constant 0 : index
    %c0_24 = arith.constant 0 : index
    %40 = vector.load %arg3[%c6, %c0_23, %c0_24] : memref<9x8x1xf32, #tpu.memory_space<vmem>>, vector<1x8x1xf32>
    %41 = vector.shape_cast %40 : vector<1x8x1xf32> to vector<8x1xf32>
    %42 = vector.broadcast %41 : vector<8x1xf32> to vector<8x256xf32>
    %43 = arith.mulf %8, %42 : vector<8x256xf32>
    %c7 = arith.constant 7 : index
    %c0_25 = arith.constant 0 : index
    %c0_26 = arith.constant 0 : index
    %44 = vector.load %arg3[%c7, %c0_25, %c0_26] : memref<9x8x1xf32, #tpu.memory_space<vmem>>, vector<1x8x1xf32>
    %45 = vector.shape_cast %44 : vector<1x8x1xf32> to vector<8x1xf32>
    %46 = vector.broadcast %45 : vector<8x1xf32> to vector<8x256xf32>
    %47 = arith.mulf %1, %46 : vector<8x256xf32>
    %48 = arith.addf %43, %47 : vector<8x256xf32>
    %c8 = arith.constant 8 : index
    %c0_27 = arith.constant 0 : index
    %c0_28 = arith.constant 0 : index
    %49 = vector.load %arg3[%c8, %c0_27, %c0_28] : memref<9x8x1xf32, #tpu.memory_space<vmem>>, vector<1x8x1xf32>
    %50 = vector.shape_cast %49 : vector<1x8x1xf32> to vector<8x1xf32>
    %51 = vector.broadcast %50 : vector<8x1xf32> to vector<8x256xf32>
    %52 = arith.mulf %11, %51 : vector<8x256xf32>
    %53 = arith.addf %48, %52 : vector<8x256xf32>
    %c16_i32 = arith.constant 16 : i32
    %54 = tpu.dynamic_rotate %25 by %c16_i32 dim 1 : vector<8x256xf32>, i32 -> vector<8x256xf32>
    %55 = vector.broadcast %4 : vector<1x256xf32> to vector<8x256xf32>
    %56 = arith.mulf %54, %55 : vector<8x256xf32>
    %57 = arith.addf %39, %56 : vector<8x256xf32>
    %c240_i32 = arith.constant 240 : i32
    %58 = tpu.dynamic_rotate %53 by %c240_i32 dim 1 : vector<8x256xf32>, i32 -> vector<8x256xf32>
    %59 = vector.broadcast %5 : vector<1x256xf32> to vector<8x256xf32>
    %60 = arith.mulf %58, %59 : vector<8x256xf32>
    %61 = arith.addf %57, %60 : vector<8x256xf32>
    %c0_29 = arith.constant 0 : index
    %c0_30 = arith.constant 0 : index
    %62 = vector.load %arg4[%c0_29, %c0_30] : memref<8x1xf32, #tpu.memory_space<vmem>>, vector<8x1xf32>
    %63 = vector.broadcast %62 : vector<8x1xf32> to vector<8x256xf32>
    %64 = arith.addf %61, %63 : vector<8x256xf32>
    %cst = arith.constant 0.000000e+00 : f32
    %65 = vector.broadcast %cst : f32 to vector<8x256xf32>
    %66 = arith.maximumf %64, %65 : vector<8x256xf32>
    %c0_31 = arith.constant 0 : index
    %c0_32 = arith.constant 0 : index
    %67 = vector.load %arg6[%c0_31, %c0_32] : memref<8x1xf32, #tpu.memory_space<vmem>>, vector<8x1xf32>
    %c0_33 = arith.constant 0 : index
    %c0_34 = arith.constant 0 : index
    %c0_35 = arith.constant 0 : index
    %68 = vector.load %arg5[%c0_33, %c0_34, %c0_35] : memref<4x8x1xf32, #tpu.memory_space<vmem>>, vector<4x8x1xf32>
    %69 = vector.extract_strided_slice %66 {offsets = [0, 0], sizes = [4, 256], strides = [1, 1]} : vector<8x256xf32> to vector<4x256xf32>
    %70 = vector.extract_strided_slice %68 {offsets = [0, 0, 0], sizes = [1, 8, 1], strides = [1, 1, 1]} : vector<4x8x1xf32> to vector<1x8x1xf32>
    %71 = vector.shape_cast %70 : vector<1x8x1xf32> to vector<8x1xf32>
    %72 = vector.extract_strided_slice %69 {offsets = [0, 0], sizes = [1, 256], strides = [1, 1]} : vector<4x256xf32> to vector<1x256xf32>
    %73 = vector.broadcast %71 : vector<8x1xf32> to vector<8x256xf32>
    %74 = vector.broadcast %72 : vector<1x256xf32> to vector<8x256xf32>
    %75 = arith.mulf %73, %74 : vector<8x256xf32>
    %76 = vector.extract_strided_slice %68 {offsets = [1, 0, 0], sizes = [1, 8, 1], strides = [1, 1, 1]} : vector<4x8x1xf32> to vector<1x8x1xf32>
    %77 = vector.shape_cast %76 : vector<1x8x1xf32> to vector<8x1xf32>
    %78 = vector.extract_strided_slice %69 {offsets = [1, 0], sizes = [1, 256], strides = [1, 1]} : vector<4x256xf32> to vector<1x256xf32>
    %79 = vector.broadcast %77 : vector<8x1xf32> to vector<8x256xf32>
    %80 = vector.broadcast %78 : vector<1x256xf32> to vector<8x256xf32>
    %81 = arith.mulf %79, %80 : vector<8x256xf32>
    %82 = arith.addf %75, %81 : vector<8x256xf32>
    %83 = vector.extract_strided_slice %68 {offsets = [2, 0, 0], sizes = [1, 8, 1], strides = [1, 1, 1]} : vector<4x8x1xf32> to vector<1x8x1xf32>
    %84 = vector.shape_cast %83 : vector<1x8x1xf32> to vector<8x1xf32>
    %85 = vector.extract_strided_slice %69 {offsets = [2, 0], sizes = [1, 256], strides = [1, 1]} : vector<4x256xf32> to vector<1x256xf32>
    %86 = vector.broadcast %84 : vector<8x1xf32> to vector<8x256xf32>
    %87 = vector.broadcast %85 : vector<1x256xf32> to vector<8x256xf32>
    %88 = arith.mulf %86, %87 : vector<8x256xf32>
    %89 = arith.addf %82, %88 : vector<8x256xf32>
    %90 = vector.extract_strided_slice %68 {offsets = [3, 0, 0], sizes = [1, 8, 1], strides = [1, 1, 1]} : vector<4x8x1xf32> to vector<1x8x1xf32>
    %91 = vector.shape_cast %90 : vector<1x8x1xf32> to vector<8x1xf32>
    %92 = vector.extract_strided_slice %69 {offsets = [3, 0], sizes = [1, 256], strides = [1, 1]} : vector<4x256xf32> to vector<1x256xf32>
    %93 = vector.broadcast %91 : vector<8x1xf32> to vector<8x256xf32>
    %94 = vector.broadcast %92 : vector<1x256xf32> to vector<8x256xf32>
    %95 = arith.mulf %93, %94 : vector<8x256xf32>
    %96 = arith.addf %89, %95 : vector<8x256xf32>
    %97 = vector.broadcast %67 : vector<8x1xf32> to vector<8x256xf32>
    %98 = arith.addf %96, %97 : vector<8x256xf32>
    %cst_36 = arith.constant 0.000000e+00 : f32
    %99 = vector.broadcast %cst_36 : f32 to vector<8x256xf32>
    %100 = arith.maximumf %98, %99 : vector<8x256xf32>
    %c0_37 = arith.constant 0 : index
    %c0_38 = arith.constant 0 : index
    %c0_39 = arith.constant 0 : index
    %101 = vector.load %arg7[%c0_37, %c0_38, %c0_39] : memref<1x16x256xf32, #tpu.memory_space<vmem>>, vector<1x8x256xf32>
    %102 = vector.shape_cast %101 : vector<1x8x256xf32> to vector<8x256xf32>
    %103 = vector.shape_cast %100 : vector<8x256xf32> to vector<1x8x256xf32>
    tpu.vector_store %arg7[%c0_37, %c0_38, %c0_39], %103 {strides = array<i32>} : memref<1x16x256xf32, #tpu.memory_space<vmem>>, vector<1x8x256xf32>,
    %104 = vector.extract_strided_slice %66 {offsets = [4, 0], sizes = [4, 256], strides = [1, 1]} : vector<8x256xf32> to vector<4x256xf32>
    %105 = vector.extract_strided_slice %68 {offsets = [0, 0, 0], sizes = [1, 8, 1], strides = [1, 1, 1]} : vector<4x8x1xf32> to vector<1x8x1xf32>
    %106 = vector.shape_cast %105 : vector<1x8x1xf32> to vector<8x1xf32>
    %107 = vector.extract_strided_slice %104 {offsets = [0, 0], sizes = [1, 256], strides = [1, 1]} : vector<4x256xf32> to vector<1x256xf32>
    %108 = vector.broadcast %106 : vector<8x1xf32> to vector<8x256xf32>
    %109 = vector.broadcast %107 : vector<1x256xf32> to vector<8x256xf32>
    %110 = arith.mulf %108, %109 : vector<8x256xf32>
    %111 = vector.extract_strided_slice %68 {offsets = [1, 0, 0], sizes = [1, 8, 1], strides = [1, 1, 1]} : vector<4x8x1xf32> to vector<1x8x1xf32>
    %112 = vector.shape_cast %111 : vector<1x8x1xf32> to vector<8x1xf32>
    %113 = vector.extract_strided_slice %104 {offsets = [1, 0], sizes = [1, 256], strides = [1, 1]} : vector<4x256xf32> to vector<1x256xf32>
    %114 = vector.broadcast %112 : vector<8x1xf32> to vector<8x256xf32>
    %115 = vector.broadcast %113 : vector<1x256xf32> to vector<8x256xf32>
    %116 = arith.mulf %114, %115 : vector<8x256xf32>
    %117 = arith.addf %110, %116 : vector<8x256xf32>
    %118 = vector.extract_strided_slice %68 {offsets = [2, 0, 0], sizes = [1, 8, 1], strides = [1, 1, 1]} : vector<4x8x1xf32> to vector<1x8x1xf32>
    %119 = vector.shape_cast %118 : vector<1x8x1xf32> to vector<8x1xf32>
    %120 = vector.extract_strided_slice %104 {offsets = [2, 0], sizes = [1, 256], strides = [1, 1]} : vector<4x256xf32> to vector<1x256xf32>
    %121 = vector.broadcast %119 : vector<8x1xf32> to vector<8x256xf32>
    %122 = vector.broadcast %120 : vector<1x256xf32> to vector<8x256xf32>
    %123 = arith.mulf %121, %122 : vector<8x256xf32>
    %124 = arith.addf %117, %123 : vector<8x256xf32>
    %125 = vector.extract_strided_slice %68 {offsets = [3, 0, 0], sizes = [1, 8, 1], strides = [1, 1, 1]} : vector<4x8x1xf32> to vector<1x8x1xf32>
    %126 = vector.shape_cast %125 : vector<1x8x1xf32> to vector<8x1xf32>
    %127 = vector.extract_strided_slice %104 {offsets = [3, 0], sizes = [1, 256], strides = [1, 1]} : vector<4x256xf32> to vector<1x256xf32>
    %128 = vector.broadcast %126 : vector<8x1xf32> to vector<8x256xf32>
    %129 = vector.broadcast %127 : vector<1x256xf32> to vector<8x256xf32>
    %130 = arith.mulf %128, %129 : vector<8x256xf32>
    %131 = arith.addf %124, %130 : vector<8x256xf32>
    %132 = vector.broadcast %67 : vector<8x1xf32> to vector<8x256xf32>
    %133 = arith.addf %131, %132 : vector<8x256xf32>
    %cst_40 = arith.constant 0.000000e+00 : f32
    %134 = vector.broadcast %cst_40 : f32 to vector<8x256xf32>
    %135 = arith.maximumf %133, %134 : vector<8x256xf32>
    %c0_41 = arith.constant 0 : index
    %c8_42 = arith.constant 8 : index
    %c0_43 = arith.constant 0 : index
    %136 = vector.load %arg7[%c0_41, %c8_42, %c0_43] : memref<1x16x256xf32, #tpu.memory_space<vmem>>, vector<1x8x256xf32>
    %137 = vector.shape_cast %136 : vector<1x8x256xf32> to vector<8x256xf32>
    %138 = vector.shape_cast %135 : vector<8x256xf32> to vector<1x8x256xf32>
    tpu.vector_store %arg7[%c0_41, %c8_42, %c0_43], %138 {strides = array<i32>} : memref<1x16x256xf32, #tpu.memory_space<vmem>>, vector<1x8x256xf32>,
    return
  }
  func.func @transform_0(%arg0: i32) -> (i32, i32, i32) {
    %c0_i32 = arith.constant 0 : i32
    %c0_i32_0 = arith.constant 0 : i32
    %c0_i32_1 = arith.constant 0 : i32
    return %arg0, %c0_i32, %c0_i32_0 : i32, i32, i32
  }
  func.func @transform_1(%arg0: i32) -> (i32, i32) {
    %c0_i32 = arith.constant 0 : i32
    %c0_i32_0 = arith.constant 0 : i32
    %c0_i32_1 = arith.constant 0 : i32
    return %c0_i32, %c0_i32_0 : i32, i32
  }
  func.func @transform_2(%arg0: i32) -> (i32, i32, i32) {
    %c0_i32 = arith.constant 0 : i32
    %c0_i32_0 = arith.constant 0 : i32
    %c0_i32_1 = arith.constant 0 : i32
    %c0_i32_2 = arith.constant 0 : i32
    return %c0_i32, %c0_i32_0, %c0_i32_1 : i32, i32, i32
  }
  func.func @transform_3(%arg0: i32) -> (i32, i32) {
    %c0_i32 = arith.constant 0 : i32
    %c0_i32_0 = arith.constant 0 : i32
    %c0_i32_1 = arith.constant 0 : i32
    return %c0_i32, %c0_i32_0 : i32, i32
  }
  func.func @transform_4(%arg0: i32) -> (i32, i32, i32) {
    %c0_i32 = arith.constant 0 : i32
    %c0_i32_0 = arith.constant 0 : i32
    %c0_i32_1 = arith.constant 0 : i32
    %c0_i32_2 = arith.constant 0 : i32
    return %c0_i32, %c0_i32_0, %c0_i32_1 : i32, i32, i32
  }
  func.func @transform_5(%arg0: i32) -> (i32, i32) {
    %c0_i32 = arith.constant 0 : i32
    %c0_i32_0 = arith.constant 0 : i32
    %c0_i32_1 = arith.constant 0 : i32
    return %c0_i32, %c0_i32_0 : i32, i32
  }
  func.func @transform_6(%arg0: i32) -> (i32, i32, i32) {
    %c0_i32 = arith.constant 0 : i32
    %c0_i32_0 = arith.constant 0 : i32
    %c0_i32_1 = arith.constant 0 : i32
    return %arg0, %c0_i32, %c0_i32_0 : i32, i32, i32
  }
}

</mosaic_0001>

<llo_original>
// kernel: tpu_custom_call.1
$region0: #{tpu_custom_call.1}
  #allocation0 [shape = 'u32[]', space=smem, size = 0x4, offset = 0x4, fixed_abs, tag = 'smem constant byte address 0x4 - core index']
  #allocation1 [shape = 'u32[144,128]{1,0:T(1,128)}', space=vmem, size = 0x12000, scoped, tag = 'internal scratch']
  %s0 = inlined_call_operand.vmem [shape: f32[1,8,256], index: 0, kind: input, shape index: {}]
  %s1 = inlined_call_operand.vmem [shape: f32[4,256], index: 1, kind: input, shape index: {}]
  %s2 = inlined_call_operand.vmem [shape: f32[9,8,1], index: 2, kind: input, shape index: {}]
  %s3 = inlined_call_operand.vmem [shape: f32[8,1], index: 3, kind: input, shape index: {}]
  %s4 = inlined_call_operand.vmem [shape: f32[4,8,1], index: 4, kind: input, shape index: {}]
  %s5 = inlined_call_operand.vmem [shape: f32[8,1], index: 5, kind: input, shape index: {}]
  %s6 = inlined_call_operand.hbm [shape: f32[1,16,256], index: 6, kind: output, shape index: {}]
  %s7 = sld [smem:[#allocation0]]
  $region34: #{tpu_custom_call.1} parent=0
    _
  %s9 = ssub.s32 1, %s7
  %s10 = scalar_select 0, %s9, %s7
  $region1: #{tpu_custom_call.1} parent=0
    #allocation2 [shape = 'u8[16384]{0}', space=vmem, size = 0x4000, scoped, tag = 'output window, operand 0, single buffered']
    #allocation3 [shape = 's32[1]{0}', space=sflag, size = 0x4, scoped, tag = 'scoped memory for tpu_custom_call.1']
    %11 = vsyncpa [#allocation3], 0
    // Predicated region
    $region2: #{tpu_custom_call.1} parent=1 // pred_check
      _
    $region3: #{tpu_custom_call.1} parent=1 // pred_check_branch
      %13 = sbr.rel (0) target = $region5
    $region4: #{tpu_custom_call.1} parent=1 // pred_region
      _
    $region5: #{tpu_custom_call.1} parent=1 // pred_fallthru
      _
    // Predicated region
    $region6: #{tpu_custom_call.1} parent=1 // pred_check
      _
    $region7: #{tpu_custom_call.1} parent=1 // pred_check_branch
      %15 = sbr.rel (0) target = $region9
    $region8: #{tpu_custom_call.1} parent=1 // pred_region
      _
    $region9: #{tpu_custom_call.1} parent=1 // pred_fallthru
      _
    // Predicated region
    $region10: #{tpu_custom_call.1} parent=1 // pred_check
      _
    $region11: #{tpu_custom_call.1} parent=1 // pred_check_branch
      %17 = sbr.rel (0) target = $region13
    $region12: #{tpu_custom_call.1} parent=1 // pred_region
      _
    $region13: #{tpu_custom_call.1} parent=1 // pred_fallthru
      _
    // Predicated region
    $region14: #{tpu_custom_call.1} parent=1 // pred_check
      _
    $region15: #{tpu_custom_call.1} parent=1 // pred_check_branch
      %19 = sbr.rel (0) target = $region17
    $region16: #{tpu_custom_call.1} parent=1 // pred_region
      _
    $region17: #{tpu_custom_call.1} parent=1 // pred_fallthru
      _
    // Predicated region
    $region18: #{tpu_custom_call.1} parent=1 // pred_check
      _
    $region19: #{tpu_custom_call.1} parent=1 // pred_check_branch
      %21 = sbr.rel (0) target = $region21
    $region20: #{tpu_custom_call.1} parent=1 // pred_region
      _
    $region21: #{tpu_custom_call.1} parent=1 // pred_fallthru
      _
    // Predicated region
    $region22: #{tpu_custom_call.1} parent=1 // pred_check
      _
    $region23: #{tpu_custom_call.1} parent=1 // pred_check_branch
      %23 = sbr.rel (0) target = $region25
    $region24: #{tpu_custom_call.1} parent=1 // pred_region
      _
    $region25: #{tpu_custom_call.1} parent=1 // pred_fallthru
      _
    %v24 = vld [vmem:[%s0] sm:$0xff]
    %v25 = vld [vmem:[%s0 + $0x8] sm:$0xff]
    %v26 = vld [vmem:[%s1] ss:$4 sm:$0x3]
    %s27 = scalar_lea.vmem %s1, 1
    %v28 = vld [vmem:[%s27] ss:$4 sm:$0x3]
    %s29 = scalar_lea.vmem %s1, 2
    %v30 = vld [vmem:[%s29] ss:$4 sm:$0x3]
    %s31 = scalar_lea.vmem %s1, 3
    %v32 = vld [vmem:[%s31] ss:$4 sm:$0x3]
    %33 = vrot.lane.b32.xlu0 %v24, 1
    %v34 = vpop.permute.xlu0 %33
    %35 = vrot.lane.b32.xlu0 %v25, 1
    %v36 = vpop.permute.xlu0 %35
    %v37 = vlaneseq
    %v38 = vand.u32 %v37, 127
    %vm39 = vcmp.lt.s32.totalorder %v38, 1
    %v40 = vsel %vm39, %v34, %v36
    %v41 = vsel %vm39, %v36, %v34
    %v43 = vlaneseq
    %v44 = vshrl.u32 %v43, 7
    %v45 = vsub.s32 0, %v44
    %v46 = vrot.slane %v26, %v45
    %v47 = vlaneseq
    %v48 = vshrl.u32 %v47, 7
    %v49 = vsub.s32 1, %v48
    %v50 = vrot.slane %v26, %v49
    %v53 = vmul.f32 %v41, %v46
    %v54 = vmul.f32 %v40, %v50
    %55 = vrot.lane.b32.xlu0 %v24, 127
    %v56 = vpop.permute.xlu0 %55
    %57 = vrot.lane.b32.xlu0 %v25, 127
    %v58 = vpop.permute.xlu0 %57
    %vm59 = vcmp.lt.s32.totalorder %v38, 127
    %v60 = vsel %vm59, %v56, %v58
    %v61 = vsel %vm59, %v58, %v56
    %v63 = vlaneseq
    %v64 = vshrl.u32 %v63, 7
    %v65 = vsub.s32 0, %v64
    %v66 = vrot.slane %v28, %v65
    %v67 = vlaneseq
    %v68 = vshrl.u32 %v67, 7
    %v69 = vsub.s32 1, %v68
    %v70 = vrot.slane %v28, %v69
    %v73 = vmul.f32 %v60, %v66
    %v74 = vmul.f32 %v61, %v70
    %v75 = vld [vmem:[%s2] sm:$0xff]
    %77 = vset.pattern.permute.xlu0 0
    %78 = vperm.xlu0 %77, %v75
    %v79 = vpop.permute.xlu0 %78
    %v81 = vmul.f32 %v53, %v79
    %v82 = vmul.f32 %v54, %v79
    %s83 = scalar_lea.vmem %s2, 8
    %v84 = vld [vmem:[%s83] sm:$0xff]
    %86 = vset.pattern.permute.xlu0 0
    %87 = vperm.xlu0 %86, %v84
    %v88 = vpop.permute.xlu0 %87
    %v90 = vmul.f32 %v24, %v88
    %v91 = vmul.f32 %v25, %v88
    %v92 = vadd.f32 %v81, %v90
    %v93 = vadd.f32 %v82, %v91
    %s94 = scalar_lea.vmem %s2, 16
    %v95 = vld [vmem:[%s94] sm:$0xff]
    %97 = vset.pattern.permute.xlu0 0
    %98 = vperm.xlu0 %97, %v95
    %v99 = vpop.permute.xlu0 %98
    %v101 = vmul.f32 %v73, %v99
    %v102 = vmul.f32 %v74, %v99
    %v103 = vadd.f32 %v92, %v101
    %v104 = vadd.f32 %v93, %v102
    %s105 = scalar_lea.vmem %s2, 24
    %v106 = vld [vmem:[%s105] sm:$0xff]
    %108 = vset.pattern.permute.xlu0 0
    %109 = vperm.xlu0 %108, %v106
    %v110 = vpop.permute.xlu0 %109
    %v112 = vmul.f32 %v53, %v110
    %v113 = vmul.f32 %v54, %v110
    %s114 = scalar_lea.vmem %s2, 32
    %v115 = vld [vmem:[%s114] sm:$0xff]
    %117 = vset.pattern.permute.xlu0 0
    %118 = vperm.xlu0 %117, %v115
    %v119 = vpop.permute.xlu0 %118
    %v121 = vmul.f32 %v24, %v119
    %v122 = vmul.f32 %v25, %v119
    %v123 = vadd.f32 %v112, %v121
    %v124 = vadd.f32 %v113, %v122
    %s125 = scalar_lea.vmem %s2, 40
    %v126 = vld [vmem:[%s125] sm:$0xff]
    %128 = vset.pattern.permute.xlu0 0
    %129 = vperm.xlu0 %128, %v126
    %v130 = vpop.permute.xlu0 %129
    %v132 = vmul.f32 %v73, %v130
    %v133 = vmul.f32 %v74, %v130
    %v134 = vadd.f32 %v123, %v132
    %v135 = vadd.f32 %v124, %v133
    %s136 = scalar_lea.vmem %s2, 48
    %v137 = vld [vmem:[%s136] sm:$0xff]
    %139 = vset.pattern.permute.xlu0 0
    %140 = vperm.xlu0 %139, %v137
    %v141 = vpop.permute.xlu0 %140
    %v143 = vmul.f32 %v53, %v141
    %v144 = vmul.f32 %v54, %v141
    %s145 = scalar_lea.vmem %s2, 56
    %v146 = vld [vmem:[%s145] sm:$0xff]
    %148 = vset.pattern.permute.xlu0 0
    %149 = vperm.xlu0 %148, %v146
    %v150 = vpop.permute.xlu0 %149
    %v152 = vmul.f32 %v24, %v150
    %v153 = vmul.f32 %v25, %v150
    %v154 = vadd.f32 %v143, %v152
    %v155 = vadd.f32 %v144, %v153
    %s156 = scalar_lea.vmem %s2, 64
    %v157 = vld [vmem:[%s156] sm:$0xff]
    %159 = vset.pattern.permute.xlu0 0
    %160 = vperm.xlu0 %159, %v157
    %v161 = vpop.permute.xlu0 %160
    %v163 = vmul.f32 %v73, %v161
    %v164 = vmul.f32 %v74, %v161
    %v165 = vadd.f32 %v154, %v163
    %v166 = vadd.f32 %v155, %v164
    %167 = vrot.lane.b32.xlu0 %v103, 16
    %v168 = vpop.permute.xlu0 %167
    %169 = vrot.lane.b32.xlu0 %v104, 16
    %v170 = vpop.permute.xlu0 %169
    %vm171 = vcmp.lt.s32.totalorder %v38, 16
    %v172 = vsel %vm171, %v168, %v170
    %v173 = vsel %vm171, %v170, %v168
    %v175 = vlaneseq
    %v176 = vshrl.u32 %v175, 7
    %v177 = vsub.s32 0, %v176
    %v178 = vrot.slane %v30, %v177
    %v179 = vlaneseq
    %v180 = vshrl.u32 %v179, 7
    %v181 = vsub.s32 1, %v180
    %v182 = vrot.slane %v30, %v181
    %v185 = vmul.f32 %v173, %v178
    %v186 = vmul.f32 %v172, %v182
    %v187 = vadd.f32 %v134, %v185
    %v188 = vadd.f32 %v135, %v186
    %189 = vrot.lane.b32.xlu0 %v165, 112
    %v190 = vpop.permute.xlu0 %189
    %191 = vrot.lane.b32.xlu0 %v166, 112
    %v192 = vpop.permute.xlu0 %191
    %vm193 = vcmp.lt.s32.totalorder %v38, 112
    %v194 = vsel %vm193, %v190, %v192
    %v195 = vsel %vm193, %v192, %v190
    %v197 = vlaneseq
    %v198 = vshrl.u32 %v197, 7
    %v199 = vsub.s32 0, %v198
    %v200 = vrot.slane %v32, %v199
    %v201 = vlaneseq
    %v202 = vshrl.u32 %v201, 7
    %v203 = vsub.s32 1, %v202
    %v204 = vrot.slane %v32, %v203
    %v207 = vmul.f32 %v194, %v200
    %v208 = vmul.f32 %v195, %v204
    %v209 = vadd.f32 %v187, %v207
    %v210 = vadd.f32 %v188, %v208
    %v211 = vld [vmem:[%s3] sm:$0xff]
    %213 = vset.pattern.permute.xlu0 0
    %214 = vperm.xlu0 %213, %v211
    %v215 = vpop.permute.xlu0 %214
    %v217 = vadd.f32 %v209, %v215
    %v218 = vadd.f32 %v210, %v215
    %v219 = vmax.f32 %v217, 0.0
    %v220 = vmax.f32 %v218, 0.0
    %v221 = vld [vmem:[%s5] sm:$0xff]
    %v222 = vld [vmem:[%s4] sm:$0xff]
    %v223 = vld [vmem:[%s4 + $0x8] sm:$0xff]
    %v224 = vld [vmem:[%s4 + $0x10] sm:$0xff]
    %v225 = vld [vmem:[%s4 + $0x18] sm:$0xff]
    %227 = vset.pattern.permute.xlu0 0
    %228 = vperm.xlu0 %227, %v222
    %v229 = vpop.permute.xlu0 %228
    %v231 = vlaneseq
    %v232 = vshrl.u32 %v231, 7
    %v233 = vsub.s32 0, %v232
    %v234 = vrot.slane %v219, %v233
    %v235 = vlaneseq
    %v236 = vshrl.u32 %v235, 7
    %v237 = vsub.s32 0, %v236
    %v238 = vrot.slane %v220, %v237
    %v239 = vmul.f32 %v229, %v234
    %v240 = vmul.f32 %v229, %v238
    %242 = vset.pattern.permute.xlu0 0
    %243 = vperm.xlu0 %242, %v223
    %v244 = vpop.permute.xlu0 %243
    %v246 = vlaneseq
    %v247 = vshrl.u32 %v246, 7
    %v248 = vsub.s32 1, %v247
    %v249 = vrot.slane %v219, %v248
    %v250 = vlaneseq
    %v251 = vshrl.u32 %v250, 7
    %v252 = vsub.s32 1, %v251
    %v253 = vrot.slane %v220, %v252
    %v254 = vmul.f32 %v244, %v249
    %v255 = vmul.f32 %v244, %v253
    %v256 = vadd.f32 %v239, %v254
    %v257 = vadd.f32 %v240, %v255
    %259 = vset.pattern.permute.xlu0 0
    %260 = vperm.xlu0 %259, %v224
    %v261 = vpop.permute.xlu0 %260
    %v263 = vlaneseq
    %v264 = vshrl.u32 %v263, 7
    %v265 = vsub.s32 2, %v264
    %v266 = vrot.slane %v219, %v265
    %v267 = vlaneseq
    %v268 = vshrl.u32 %v267, 7
    %v269 = vsub.s32 2, %v268
    %v270 = vrot.slane %v220, %v269
    %v271 = vmul.f32 %v261, %v266
    %v272 = vmul.f32 %v261, %v270
    %v273 = vadd.f32 %v256, %v271
    %v274 = vadd.f32 %v257, %v272
    %276 = vset.pattern.permute.xlu0 0
    %277 = vperm.xlu0 %276, %v225
    %v278 = vpop.permute.xlu0 %277
    %v280 = vlaneseq
    %v281 = vshrl.u32 %v280, 7
    %v282 = vsub.s32 3, %v281
    %v283 = vrot.slane %v219, %v282
    %v284 = vlaneseq
    %v285 = vshrl.u32 %v284, 7
    %v286 = vsub.s32 3, %v285
    %v287 = vrot.slane %v220, %v286
    %v288 = vmul.f32 %v278, %v283
    %v289 = vmul.f32 %v278, %v287
    %v290 = vadd.f32 %v273, %v288
    %v291 = vadd.f32 %v274, %v289
    %293 = vset.pattern.permute.xlu0 0
    %294 = vperm.xlu0 %293, %v221
    %v295 = vpop.permute.xlu0 %294
    %v297 = vadd.f32 %v290, %v295
    %v298 = vadd.f32 %v291, %v295
    %v299 = vmax.f32 %v297, 0.0
    %v300 = vmax.f32 %v298, 0.0
    %301 = vst [vmem:[#allocation2] sm:$0xff] %v299
    %302 = vst [vmem:[#allocation2 + $0x8] sm:$0xff] %v300
    %v303 = vlaneseq
    %v304 = vshrl.u32 %v303, 7
    %v305 = vsub.s32 4, %v304
    %v306 = vrot.slane %v219, %v305
    %v307 = vlaneseq
    %v308 = vshrl.u32 %v307, 7
    %v309 = vsub.s32 4, %v308
    %v310 = vrot.slane %v220, %v309
    %v311 = vmul.f32 %v229, %v306
    %v312 = vmul.f32 %v229, %v310
    %v313 = vlaneseq
    %v314 = vshrl.u32 %v313, 7
    %v315 = vsub.s32 5, %v314
    %v316 = vrot.slane %v219, %v315
    %v317 = vlaneseq
    %v318 = vshrl.u32 %v317, 7
    %v319 = vsub.s32 5, %v318
    %v320 = vrot.slane %v220, %v319
    %v321 = vmul.f32 %v244, %v316
    %v322 = vmul.f32 %v244, %v320
    %v323 = vadd.f32 %v311, %v321
    %v324 = vadd.f32 %v312, %v322
    %v325 = vlaneseq
    %v326 = vshrl.u32 %v325, 7
    %v327 = vsub.s32 6, %v326
    %v328 = vrot.slane %v219, %v327
    %v329 = vlaneseq
    %v330 = vshrl.u32 %v329, 7
    %v331 = vsub.s32 6, %v330
    %v332 = vrot.slane %v220, %v331
    %v333 = vmul.f32 %v261, %v328
    %v334 = vmul.f32 %v261, %v332
    %v335 = vadd.f32 %v323, %v333
    %v336 = vadd.f32 %v324, %v334
    %v337 = vlaneseq
    %v338 = vshrl.u32 %v337, 7
    %v339 = vsub.s32 7, %v338
    %v340 = vrot.slane %v219, %v339
    %v341 = vlaneseq
    %v342 = vshrl.u32 %v341, 7
    %v343 = vsub.s32 7, %v342
    %v344 = vrot.slane %v220, %v343
    %v345 = vmul.f32 %v278, %v340
    %v346 = vmul.f32 %v278, %v344
    %v347 = vadd.f32 %v335, %v345
    %v348 = vadd.f32 %v336, %v346
    %v349 = vadd.f32 %v347, %v295
    %v350 = vadd.f32 %v348, %v295
    %v351 = vmax.f32 %v349, 0.0
    %v352 = vmax.f32 %v350, 0.0
    %353 = vst [vmem:[#allocation2 + $0x10] sm:$0xff] %v351
    %354 = vst [vmem:[#allocation2 + $0x18] sm:$0xff] %v352
    // Predicated region
    $region26: #{tpu_custom_call.1} parent=1 // pred_check
      _
    $region27: #{tpu_custom_call.1} parent=1 // pred_check_branch
      %356 = sbr.rel (0) target = $region29
    $region28: #{tpu_custom_call.1} parent=1 // pred_region
      %s358 = ssub.s32 512, 512
      %359 = vsyncadd [#allocation3], %s358
      %s360 = sshll.u32 [#allocation2], 4
      %s361 = int_to_ptr.vmem [resolvable:$true] %s360
      %366 = dma.vmem_to_hbm [thread:$0]  %s361, 512, %s6, [#allocation3], 256, 256, 16
    $region29: #{tpu_custom_call.1} parent=1 // pred_fallthru
      _
    // Predicated region
    $region30: #{tpu_custom_call.1} parent=1 // pred_check
      _
    $region31: #{tpu_custom_call.1} parent=1 // pred_check_branch
      %368 = sbr.rel (0) target = $region33
    $region32: #{tpu_custom_call.1} parent=1 // pred_region
      %369 = dma.done [#allocation3], 512
    $region33: #{tpu_custom_call.1} parent=1 // pred_fallthru
      _
    %370 = vsyncpa [#allocation3], 1

</llo_original>
